<compile_context>
chip_gen: v6e
topology: v6e:2x2x1
jax: 0.10.0
libtpu: 0.0.40
codegen_flags: <defaults>
</compile_context>

<pallas_src>
import jax
import jax.numpy as jnp
from jax.experimental import pallas as pl
from jax.experimental.pallas import tpu as pltpu


def _round_up(x, m):
    return ((x + m - 1) // m) * m


def _make_projector_kernel(compute_dtype):
    def kernel(x_ref, w_ref, b_ref, o_ref):
        # x_ref: (tm, H) native dtype  (cast to bf16 here -> no extra HBM pass)
        # w_ref: (H, Pp) bf16, VMEM-resident     b_ref: (1, Pp) f32, resident
        # o_ref: (tm, Pp) out dtype
        x = x_ref[...].astype(compute_dtype)
        acc = jnp.dot(x, w_ref[...], preferred_element_type=jnp.float32)
        o_ref[...] = (acc + b_ref[...]).astype(o_ref.dtype)
    return kernel


def paligemma_projector(image_features, weight_t, bias, *, tm=1024,
                        compute_dtype=jnp.bfloat16, out_dtype=None):
    """image_features: [B, S, H], weight_t: [H, P], bias: [P] -> [B, S, P]."""
    B, S, H = image_features.shape
    Hw, P = weight_t.shape
    assert Hw == H, "weight_t must be [H, P]"
    M = B * S
    if out_dtype is None:
        out_dtype = image_features.dtype

    # Pad P to a multiple of 128 only if needed (lane-dense output stores).
    # Real PaliGemma projection dims (2048 / 2304) are already multiples of 128.
    Pp = _round_up(P, 128)

    x_item = jnp.dtype(image_features.dtype).itemsize
    c_item = jnp.dtype(compute_dtype).itemsize
    o_item = jnp.dtype(out_dtype).itemsize

    def working_set(tm_):
        return (2 * tm_ * H * x_item        # x tiles, double-buffered (native dtype)
                + H * Pp * c_item           # resident weight, single-buffered
                + Pp * 4                    # resident bias
                + 2 * tm_ * Pp * o_item)    # out tiles, double-buffered

    # Per-step working-set target: safe under v7x's 64 MiB physical VMEM.
    VMEM_BUDGET = 40 * 1024 * 1024

    if M <= tm:
        # Single M tile equal to the full array dim (always layout-legal).
        tm_eff = M
    else:
        tm_eff = tm  # multiple of 256 by default (256-wide MXU on v6e/v7x)
        while tm_eff > 256 and working_set(tm_eff) > VMEM_BUDGET:
            tm_eff //= 2

    grid = (pl.cdiv(M, tm_eff),)

    # Flatten x (metadata reshape only: no cast, no pad -> no extra HBM passes).
    x2d = image_features.reshape(M, H)

    # Weight/bias are small one-time conversions (done once at param-load time
    # in a real model); cast W to bf16 for the MXU, keep bias in f32.
    w2d = weight_t.astype(compute_dtype)
    b2d = bias.astype(jnp.float32).reshape(1, P)
    if Pp != P:
        w2d = jnp.pad(w2d, ((0, 0), (0, Pp - P)))
        b2d = jnp.pad(b2d, ((0, 0), (0, Pp - P)))

    # Advisory cost estimate so XLA can schedule around this call.
    cost = pl.CostEstimate(
        flops=2 * M * H * Pp,
        transcendentals=0,
        bytes_accessed=(M * H * x_item          # x read once
                        + H * Pp * c_item       # weight read once (resident)
                        + Pp * 4                # bias read once
                        + M * Pp * o_item),     # output written once
    )

    # Scoped VMEM limit: >= 32 MiB (above v5e's 16 MiB default so the resident-W
    # working set fits), <= 48 MiB (headroom under v7x's 64 MiB physical VMEM).
    vmem_limit = int(min(48 * 1024 * 1024,
                         max(32 * 1024 * 1024, (5 * working_set(tm_eff)) // 4)))

    out2d = pl.pallas_call(
        _make_projector_kernel(compute_dtype),
        out_shape=jax.ShapeDtypeStruct((M, Pp), out_dtype),
        grid_spec=pltpu.PrefetchScalarGridSpec(
            num_scalar_prefetch=0,
            grid=grid,
            in_specs=[
                # x tile: walks M.
                pl.BlockSpec((tm_eff, H), lambda i: (i, 0)),
                # Weight: constant block index -> fetched once, single-buffered.
                pl.BlockSpec((H, Pp), lambda i: (0, 0),
                             pipeline_mode=pl.Buffered(1)),
                # Bias: constant block index -> fetched once, single-buffered.
                pl.BlockSpec((1, Pp), lambda i: (0, 0),
                             pipeline_mode=pl.Buffered(1)),
            ],
            out_specs=pl.BlockSpec((tm_eff, Pp), lambda i: (i, 0)),
        ),
        compiler_params=pltpu.CompilerParams(
            dimension_semantics=("parallel",),   # two v7x TCs split the M axis
            vmem_limit_bytes=vmem_limit,
        ),
        cost_estimate=cost,
    )(x2d, w2d, b2d)

    if Pp != P:
        out2d = out2d[:, :P]   # no-op for real PaliGemma shapes (P % 128 == 0)
    return out2d.reshape(B, S, P)


if __name__ == "__main__":
    # Small config consistent with the module:
    #   vision_config.hidden_size = 32, projection_dim = 64
    B, S, H, PROJ = 2, 8, 32, 64

    key = jax.random.PRNGKey(0)
    k_x, k_w, k_b = jax.random.split(key, 3)

    image_features = jax.random.normal(k_x, (B, S, H), dtype=jnp.float32)

    # Deterministic parameter init (PyTorch Linear stores weight as [P, H]).
    weight = jax.random.normal(k_w, (PROJ, H), dtype=jnp.float32) * (1.0 / H**0.5)
    bias = jax.random.normal(k_b, (PROJ,), dtype=jnp.float32) * 0.01
    weight_t = weight.T  # [H, P] layout for the kernel

    out = paligemma_projector(image_features, weight_t, bias)
    out = jax.block_until_ready(out)

    # Reference check against plain JAX (same semantics as nn.Linear).
    # Tolerance accounts for the bf16 cast of x / W (f32 accumulation).
    ref = image_features @ weight.T + bias
    assert out.shape == (B, S, PROJ)
    assert jnp.allclose(out, ref, atol=2e-2, rtol=2e-2), (
        float(jnp.max(jnp.abs(out - ref))))

    print("KERNEL_OK")
</pallas_src>

<mosaic_0001>
module attributes {stable_mosaic.version = 11 : i64} {
  func.func @kernel(%arg0: i32, %arg1: memref<16x32xf32, #tpu.memory_space<vmem>>, %arg2: memref<32x128xbf16, #tpu.memory_space<vmem>>, %arg3: memref<1x128xf32, #tpu.memory_space<vmem>>, %arg4: memref<16x128xf32, #tpu.memory_space<vmem>>) attributes {dimension_semantics = [#tpu.dimension_semantics<parallel>], iteration_bounds = array<i64: 1>, scalar_prefetch = 0 : i64, scratch_operands = 0 : i64, tpu.core_type = #tpu.core_type<tc>, window_params = [{transform_indices = @transform_0, window_bounds = array<i64: 16, 32>}, {pipeline_mode = #tpu.pipeline_mode<synchronous>, transform_indices = @transform_1, window_bounds = array<i64: 32, 128>}, {pipeline_mode = #tpu.pipeline_mode<synchronous>, transform_indices = @transform_2, window_bounds = array<i64: 1, 128>}, {transform_indices = @transform_3, window_bounds = array<i64: 16, 128>}]} {
    %c0 = arith.constant 0 : index
    %c0_0 = arith.constant 0 : index
    %0 = vector.load %arg1[%c0, %c0_0] : memref<16x32xf32, #tpu.memory_space<vmem>>, vector<16x32xf32>
    %1 = arith.truncf %0 : vector<16x32xf32> to vector<16x32xbf16>
    %c0_1 = arith.constant 0 : index
    %c0_2 = arith.constant 0 : index
    %2 = vector.load %arg2[%c0_1, %c0_2] : memref<32x128xbf16, #tpu.memory_space<vmem>>, vector<32x128xbf16>
    %cst = arith.constant dense<0.000000e+00> : vector<16x128xf32>
    %3 = tpu.matmul %1, %2, %cst {dimension_numbers = #tpu.dot_dimension_numbers<[1], [0], [0], [1], [0, 0, 1, 1], [], []>} : vector<16x32xbf16>, vector<32x128xbf16>, vector<16x128xf32> -> vector<16x128xf32>
    %c0_3 = arith.constant 0 : index
    %c0_4 = arith.constant 0 : index
    %4 = vector.load %arg3[%c0_3, %c0_4] : memref<1x128xf32, #tpu.memory_space<vmem>>, vector<1x128xf32>
    %5 = vector.broadcast %4 : vector<1x128xf32> to vector<16x128xf32>
    %6 = arith.addf %3, %5 : vector<16x128xf32>
    %c0_5 = arith.constant 0 : index
    %c0_6 = arith.constant 0 : index
    %7 = vector.load %arg4[%c0_5, %c0_6] : memref<16x128xf32, #tpu.memory_space<vmem>>, vector<16x128xf32>
    tpu.vector_store %arg4[%c0_5, %c0_6], %6 {strides = array<i32>} : memref<16x128xf32, #tpu.memory_space<vmem>>, vector<16x128xf32>,
    return
  }
  func.func @transform_0(%arg0: i32) -> (i32, i32) {
    %c0_i32 = arith.constant 0 : i32
    %c0_i32_0 = arith.constant 0 : i32
    return %arg0, %c0_i32 : i32, i32
  }
  func.func @transform_1(%arg0: i32) -> (i32, i32) {
    %c0_i32 = arith.constant 0 : i32
    %c0_i32_0 = arith.constant 0 : i32
    %c0_i32_1 = arith.constant 0 : i32
    return %c0_i32, %c0_i32_0 : i32, i32
  }
  func.func @transform_2(%arg0: i32) -> (i32, i32) {
    %c0_i32 = arith.constant 0 : i32
    %c0_i32_0 = arith.constant 0 : i32
    %c0_i32_1 = arith.constant 0 : i32
    return %c0_i32, %c0_i32_0 : i32, i32
  }
  func.func @transform_3(%arg0: i32) -> (i32, i32) {
    %c0_i32 = arith.constant 0 : i32
    %c0_i32_0 = arith.constant 0 : i32
    return %arg0, %c0_i32 : i32, i32
  }
}

</mosaic_0001>

<llo_original>
// kernel: tpu_custom_call.1
$region0: #{tpu_custom_call.1}
  #allocation0 [shape = 'u32[]', space=smem, size = 0x4, offset = 0x4, fixed_abs, tag = 'smem constant byte address 0x4 - core index']
  #allocation1 [shape = 'u32[144,128]{1,0:T(1,128)}', space=vmem, size = 0x12000, scoped, tag = 'internal scratch']
  %s0 = inlined_call_operand.hbm [shape: f32[16,32], index: 0, kind: input, shape index: {}]
  %s1 = inlined_call_operand.hbm [shape: bf16[32,128], index: 1, kind: input, shape index: {}]
  %s2 = inlined_call_operand.vmem [shape: f32[1,128], index: 2, kind: input, shape index: {}]
  %s3 = inlined_call_operand.hbm [shape: f32[16,128], index: 3, kind: output, shape index: {}]
  %s4 = sld [smem:[#allocation0]]
  $region30: #{tpu_custom_call.1} parent=0
    _
  %s6 = ssub.s32 1, %s4
  %s7 = scalar_select 0, %s6, %s4
  $region1: #{tpu_custom_call.1} parent=0
    #allocation2 [shape = 'u8[8192]{0}', space=vmem, size = 0x2000, scoped, tag = 'input window, operand 0, single buffered']
    #allocation3 [shape = 's32[1]{0}', space=sflag, size = 0x4, scoped, tag = 'scoped memory for tpu_custom_call.1']
    #allocation4 [shape = 's32[1]{0}', space=sflag, size = 0x4, scoped, tag = 'scoped memory for tpu_custom_call.1']
    #allocation5 [shape = 'u8[8192]{0}', space=vmem, size = 0x2000, scoped, tag = 'input window, operand 1, single buffered']
    #allocation6 [shape = 's32[1]{0}', space=sflag, size = 0x4, scoped, tag = 'scoped memory for tpu_custom_call.1']
    #allocation7 [shape = 'u8[8192]{0}', space=vmem, size = 0x2000, scoped, tag = 'output window, operand 0, single buffered']
    %8 = vsyncpa [#allocation3], 0
    %9 = vsyncpa [#allocation6], 0
    %10 = vsyncpa [#allocation4], 0
    // Predicated region
    $region2: #{tpu_custom_call.1} parent=1 // pred_check
      _
    $region3: #{tpu_custom_call.1} parent=1 // pred_check_branch
      %12 = sbr.rel (0) target = $region5
    $region4: #{tpu_custom_call.1} parent=1 // pred_region
      %s14 = ssub.s32 256, 256
      %15 = vsyncadd [#allocation3], %s14
      %s16 = sshll.u32 [#allocation2], 4
      %s17 = int_to_ptr.vmem [resolvable:$true] %s16
      %22 = dma.hbm_to_vmem [thread:$0]  %s0, 256, %s17, [#allocation3], 128, 128, 8
    $region5: #{tpu_custom_call.1} parent=1 // pred_fallthru
      _
    // Predicated region
    $region6: #{tpu_custom_call.1} parent=1 // pred_check
      _
    $region7: #{tpu_custom_call.1} parent=1 // pred_check_branch
      %24 = sbr.rel (0) target = $region9
    $region8: #{tpu_custom_call.1} parent=1 // pred_region
      %s26 = ssub.s32 256, 256
      %27 = vsyncadd [#allocation6], %s26
      %s28 = sshll.u32 [#allocation5], 4
      %s29 = int_to_ptr.vmem [resolvable:$true] %s28
      %34 = dma.hbm_to_vmem [thread:$0]  %s1, 256, %s29, [#allocation6], 64, 64, 4
    $region9: #{tpu_custom_call.1} parent=1 // pred_fallthru
      _
    // Predicated region
    $region10: #{tpu_custom_call.1} parent=1 // pred_check
      _
    $region11: #{tpu_custom_call.1} parent=1 // pred_check_branch
      %36 = sbr.rel (0) target = $region13
    $region12: #{tpu_custom_call.1} parent=1 // pred_region
      _
    $region13: #{tpu_custom_call.1} parent=1 // pred_fallthru
      _
    // Predicated region
    $region14: #{tpu_custom_call.1} parent=1 // pred_check
      _
    $region15: #{tpu_custom_call.1} parent=1 // pred_check_branch
      %38 = sbr.rel (0) target = $region17
    $region16: #{tpu_custom_call.1} parent=1 // pred_region
      %39 = dma.done [#allocation3], 256
    $region17: #{tpu_custom_call.1} parent=1 // pred_fallthru
      _
    // Predicated region
    $region18: #{tpu_custom_call.1} parent=1 // pred_check
      _
    $region19: #{tpu_custom_call.1} parent=1 // pred_check_branch
      %41 = sbr.rel (0) target = $region21
    $region20: #{tpu_custom_call.1} parent=1 // pred_region
      %42 = dma.done [#allocation6], 256
    $region21: #{tpu_custom_call.1} parent=1 // pred_fallthru
      _
    %v44 = vld [vmem:[#allocation2] sm:$0xff]
    %v45 = vld [vmem:[#allocation2 + $0x8] sm:$0xff]
    %v46 = vpack.c.bf16 %v45, %v44
    %v47 = vld [vmem:[#allocation5] sm:$0xf]
    %v48 = vld [vmem:[#allocation5 + $0x4] sm:$0xf]
    %v49 = vld [vmem:[#allocation5 + $0x8] sm:$0xf]
    %v50 = vld [vmem:[#allocation5 + $0xc] sm:$0xf]
    %v51 = vld [vmem:[%s2] sm:$0x1]
    %v53 = vlaneseq
    %v54 = vshrl.u32 %v53, 7
    %v55 = vsub.s32 0, %v54
    %v56 = vrot.slane %v51, %v55
    %v62 = vunpack.c.l.b16 %v47
    %v63 = vunpack.c.l.b16 %v48
    %v64 = vunpack.c.l.b16 %v49
    %v65 = vunpack.c.l.b16 %v50
    %v66 = vpack.c.b16 %v63, %v62
    %v67 = vpack.c.b16 %v65, %v64
    %vm70 = vcmask 261120
    %v72 = vsel %vm70, %v46, 0
    %74 = vmatprep.subr.bf16.mxu0 0
    %75 = vmatpush1.bf16.msra.mxu0 0
    %76 = vmatprep.subr.bf16.mxu0 0
    %77 = vmatpush1.bf16.msra.mxu0 0
    %78 = vmatprep.subr.bf16.mxu0 0
    %79 = vmatpush1.bf16.msra.mxu0 0
    %80 = vmatprep.subr.bf16.mxu0 0
    %81 = vmatpush1.bf16.msra.mxu0 0
    %82 = vmatprep.subr.bf16.mxu0 0
    %83 = vmatpush1.bf16.msra.mxu0 0
    %84 = vmatprep.subr.bf16.mxu0 0
    %85 = vmatpush1.bf16.msra.mxu0 0
    %86 = vmatprep.subr.bf16.mxu0 0
    %87 = vmatpush1.bf16.msra.mxu0 %v67
    %88 = vmatprep.subr.bf16.mxu0 0
    %89 = vmatpush1.bf16.msra.mxu0 %v66
    %90 = vmatprep.subr.bf16.mxu0 0
    %91 = vmatpush2.bf16.msra.mxu0 0
    %92 = vmatprep.subr.bf16.mxu0 0
    %93 = vmatpush2.bf16.msra.mxu0 0
    %94 = vmatprep.subr.bf16.mxu0 0
    %95 = vmatpush2.bf16.msra.mxu0 0
    %96 = vmatprep.subr.bf16.mxu0 0
    %97 = vmatpush2.bf16.msra.mxu0 0
    %98 = vmatprep.subr.bf16.mxu0 0
    %99 = vmatpush2.bf16.msra.mxu0 0
    %100 = vmatprep.subr.bf16.mxu0 0
    %101 = vmatpush2.bf16.msra.mxu0 0
    %102 = vmatprep.subr.bf16.mxu0 0
    %103 = vmatpush2.bf16.msra.mxu0 0
    %104 = vmatprep.subr.bf16.mxu0 0
    %105 = vmatpush2.bf16.msra.mxu0 0
    %106 = vmatprep.mubr.bf16.mxu0 0
    %107 = vmatmul.mubr.bf16.gmra.mxu0 %v72
    %v108 = vpop.f32.mrf.mxu0
    %v109 = vadd.f32 %v56, %v108
    %v110 = vpop.f32.mrf.mxu0
    %v111 = vpop.f32.mrf.mxu0
    %v112 = vadd.f32 %v56, %v111
    %v113 = vpop.f32.mrf.mxu0
    %114 = vdwg.mxu0
    %115 = vst [vmem:[#allocation7] sm:$0xff] %v109
    %116 = vst [vmem:[#allocation7 + $0x8] sm:$0xff] %v112
    // Predicated region
    $region22: #{tpu_custom_call.1} parent=1 // pred_check
      _
    $region23: #{tpu_custom_call.1} parent=1 // pred_check_branch
      %118 = sbr.rel (0) target = $region25
    $region24: #{tpu_custom_call.1} parent=1 // pred_region
      %s120 = ssub.s32 256, 256
      %121 = vsyncadd [#allocation4], %s120
      %s122 = sshll.u32 [#allocation7], 4
      %s123 = int_to_ptr.vmem [resolvable:$true] %s122
      %128 = dma.vmem_to_hbm [thread:$0]  %s123, 256, %s3, [#allocation4], 128, 128, 8
    $region25: #{tpu_custom_call.1} parent=1 // pred_fallthru
      _
    // Predicated region
    $region26: #{tpu_custom_call.1} parent=1 // pred_check
      _
    $region27: #{tpu_custom_call.1} parent=1 // pred_check_branch
      %130 = sbr.rel (0) target = $region29
    $region28: #{tpu_custom_call.1} parent=1 // pred_region
      %131 = dma.done [#allocation4], 256
    $region29: #{tpu_custom_call.1} parent=1 // pred_fallthru
      _
    %132 = vsyncpa [#allocation3], 1
    %133 = vsyncpa [#allocation6], 1
    %134 = vsyncpa [#allocation4], 1

</llo_original>
